<compile_context>
chip_gen: v7x
topology: tpu7x:2x2x1
jax: 0.10.0
libtpu: 0.0.40
codegen_flags: <defaults>
</compile_context>

<pallas_src>
import jax
import jax.numpy as jnp
from jax.experimental import pallas as pl
from jax.experimental.pallas import tpu as pltpu


def _swish_kernel(x_ref, o_ref):
    xf = x_ref[...].astype(jnp.float32)          # compute in f32 for accuracy
    # Numerically stable, single-EUP-op sigmoid (no NaN/Inf for large |x|).
    o_ref[...] = (xf * jax.nn.sigmoid(xf)).astype(o_ref.dtype)


def _swish_slab(slab, *, target_block_bytes):
    """Run the kernel over a lane-dense (rows, 128) slab."""
    rows, lane = slab.shape
    itemsize = jnp.dtype(slab.dtype).itemsize

    # Dtype-native sublane multiple: 8 for f32, 16 for bf16, 32 for int8/fp8.
    sub = max(8, 32 // itemsize)

    # Biggest block that fits the ~2 MiB target (4x block of VMEM with in+out
    # double-buffered = 8 MiB, inside v5e's 16 MiB default scoped limit).
    tile_rows = max(sub, (target_block_bytes // (lane * itemsize)) // sub * sub)
    if tile_rows >= rows:
        tile_rows = rows          # single full-extent block (divisibility waived)

    grid = (pl.cdiv(rows, tile_rows),)

    return pl.pallas_call(
        _swish_kernel,
        out_shape=jax.ShapeDtypeStruct(slab.shape, slab.dtype),
        grid=grid,
        in_specs=[pl.BlockSpec((tile_rows, lane), lambda i: (i, 0))],
        out_specs=pl.BlockSpec((tile_rows, lane), lambda i: (i, 0)),
        compiler_params=pltpu.CompilerParams(
            dimension_semantics=("parallel",)),
    )(slab)


def swish(x, *, lane=128, target_block_bytes=2 << 20):
    """Elementwise swish (x * sigmoid(x)) for any shape / dtype."""
    orig_shape = x.shape
    dtype = x.dtype
    n = x.size
    if n == 0:
        return x

    n_main = (n // lane) * lane

    # Fast path: flat size is lane-divisible (typical NCHW activation sizes).
    if n_main == n:
        out = _swish_slab(x.reshape(n // lane, lane),
                          target_block_bytes=target_block_bytes)
        return out.reshape(orig_shape)

    # Ragged path: kernel on the aligned prefix, tiny (<128-elem) tail in JAX.
    # TODO(synk): handle the tail with a masked final block in-kernel instead.
    flat = x.reshape(-1)
    pieces = []
    if n_main > 0:
        head = _swish_slab(flat[:n_main].reshape(-1, lane),
                           target_block_bytes=target_block_bytes)
        pieces.append(head.reshape(-1))
    tail = flat[n_main:].astype(jnp.float32)
    pieces.append((tail * jax.nn.sigmoid(tail)).astype(dtype))
    return jnp.concatenate(pieces).reshape(orig_shape)


def _ref(x):
    xf = x.astype(jnp.float32)
    return (xf * jax.nn.sigmoid(xf)).astype(x.dtype)


if __name__ == "__main__":
    key = jax.random.PRNGKey(0)

    # Primary shape from the module spec (NCHW).
    x = jax.random.normal(key, (2, 4, 16, 16), dtype=jnp.float32)
    y = swish(x)
    jax.block_until_ready(y)
    assert jnp.allclose(y, _ref(x), atol=1e-5, rtol=1e-5), "mismatch (2,4,16,16)"

    # Medium case: exercises the large single-block path.
    x2 = jax.random.normal(jax.random.PRNGKey(1), (8, 16, 32, 32), dtype=jnp.float32)
    y2 = swish(x2)
    jax.block_until_ready(y2)
    assert jnp.allclose(y2, _ref(x2), atol=1e-5, rtol=1e-5), "mismatch (8,16,32,32)"

    # Extreme values: previously produced NaN via the approx-rcp Newton step.
    x3 = jax.random.normal(jax.random.PRNGKey(2), (8, 128), dtype=jnp.float32)
    x3 = x3.at[0, 0].set(-1e4).at[0, 1].set(1e4).at[0, 2].set(-100.0).at[0, 3].set(100.0)
    y3 = swish(x3)
    jax.block_until_ready(y3)
    assert jnp.all(jnp.isfinite(y3)), "non-finite output for extreme inputs"
    assert jnp.allclose(y3, _ref(x3), atol=1e-5, rtol=1e-5), "mismatch extreme values"

    # Ragged case: exercises the prefix/tail fallback path.
    x4 = jax.random.normal(jax.random.PRNGKey(3), (3, 5, 7), dtype=jnp.float32)
    y4 = swish(x4)
    jax.block_until_ready(y4)
    assert jnp.allclose(y4, _ref(x4), atol=1e-5, rtol=1e-5), "mismatch (3,5,7)"

    # bf16 case: exercises the 16-row sublane-multiple path.
    x5 = jax.random.normal(jax.random.PRNGKey(4), (4, 16, 32), dtype=jnp.bfloat16)
    y5 = swish(x5)
    jax.block_until_ready(y5)
    assert jnp.allclose(y5.astype(jnp.float32), _ref(x5).astype(jnp.float32),
                        atol=1e-2, rtol=1e-2), "mismatch bf16"

    print("KERNEL_OK")
</pallas_src>

<mosaic_0001>
module attributes {stable_mosaic.version = 11 : i64} {
  func.func @_swish_kernel(%arg0: i32, %arg1: memref<16x128xf32, #tpu.memory_space<vmem>>, %arg2: memref<16x128xf32, #tpu.memory_space<vmem>>) attributes {dimension_semantics = [#tpu.dimension_semantics<parallel>], iteration_bounds = array<i64: 1>, scalar_prefetch = 0 : i64, scratch_operands = 0 : i64, tpu.core_type = #tpu.core_type<tc>, window_params = [{transform_indices = @transform_0, window_bounds = array<i64: 16, 128>}, {transform_indices = @transform_1, window_bounds = array<i64: 16, 128>}]} {
    %c0 = arith.constant 0 : index
    %c0_0 = arith.constant 0 : index
    %0 = vector.load %arg1[%c0, %c0_0] : memref<16x128xf32, #tpu.memory_space<vmem>>, vector<16x128xf32>
    %1 = arith.negf %0 : vector<16x128xf32>
    %2 = math.exp %1 : vector<16x128xf32>
    %cst = arith.constant 1.000000e+00 : f32
    %3 = vector.broadcast %cst : f32 to vector<16x128xf32>
    %4 = arith.addf %3, %2 : vector<16x128xf32>
    %5 = arith.divf %3, %4 : vector<16x128xf32>
    %6 = arith.mulf %0, %5 : vector<16x128xf32>
    %c0_1 = arith.constant 0 : index
    %c0_2 = arith.constant 0 : index
    %7 = vector.load %arg2[%c0_1, %c0_2] : memref<16x128xf32, #tpu.memory_space<vmem>>, vector<16x128xf32>
    tpu.vector_store %arg2[%c0_1, %c0_2], %6 {strides = array<i32>} : memref<16x128xf32, #tpu.memory_space<vmem>>, vector<16x128xf32>,
    return
  }
  func.func @transform_0(%arg0: i32) -> (i32, i32) {
    %c0_i32 = arith.constant 0 : i32
    %c0_i32_0 = arith.constant 0 : i32
    return %arg0, %c0_i32 : i32, i32
  }
  func.func @transform_1(%arg0: i32) -> (i32, i32) {
    %c0_i32 = arith.constant 0 : i32
    %c0_i32_0 = arith.constant 0 : i32
    return %arg0, %c0_i32 : i32, i32
  }
}

</mosaic_0001>

<llo_original>
// kernel: tpu_custom_call.1
$region0: #{tpu_custom_call.1}
  #allocation0 [shape = 'u32[]', space=smem, size = 0x4, offset = 0x4, fixed_abs, tag = 'smem constant byte address 0x4 - core index']
  #allocation1 [shape = 'u32[144,128]{1,0:T(1,128)}', space=vmem, size = 0x12000, scoped, tag = 'internal scratch']
  %s0 = inlined_call_operand.hbm [shape: f32[16,128], index: 0, kind: input, shape index: {}]
  %s1 = inlined_call_operand.hbm [shape: f32[16,128], index: 1, kind: output, shape index: {}]
  %s2 = sld [smem:[#allocation0]]
  $region18: #{tpu_custom_call.1} parent=0
    _
  %s4 = ssub.s32 1, %s2
  %s5 = scalar_select 0, %s4, %s2
  $region1: #{tpu_custom_call.1} parent=0
    #allocation2 [shape = 'u8[8192]{0}', space=vmem, size = 0x2000, scoped, tag = 'input window, operand 0, single buffered']
    #allocation3 [shape = 's32[1]{0}', space=sflag, size = 0x4, scoped, tag = 'scoped memory for tpu_custom_call.1']
    #allocation4 [shape = 's32[1]{0}', space=sflag, size = 0x4, scoped, tag = 'scoped memory for tpu_custom_call.1']
    #allocation5 [shape = 'u8[8192]{0}', space=vmem, size = 0x2000, scoped, tag = 'output window, operand 0, single buffered']
    %6 = vsyncpa [#allocation3], 0
    %7 = vsyncpa [#allocation4], 0
    // Predicated region
    $region2: #{tpu_custom_call.1} parent=1 // pred_check
      _
    $region3: #{tpu_custom_call.1} parent=1 // pred_check_branch
      %9 = sbr.rel (0) target = $region5
    $region4: #{tpu_custom_call.1} parent=1 // pred_region
      %s11 = ssub.s32 256, 256
      %12 = vsyncadd [#allocation3], %s11
      %s13 = sshll.u32 [#allocation2], 4
      %s14 = int_to_ptr.vmem [resolvable:$true] %s13
      %19 = dma.hbm_to_vmem [thread:$0]  %s0, 256, %s14, [#allocation3], 128, 128, 8
    $region5: #{tpu_custom_call.1} parent=1 // pred_fallthru
      _
    // Predicated region
    $region6: #{tpu_custom_call.1} parent=1 // pred_check
      _
    $region7: #{tpu_custom_call.1} parent=1 // pred_check_branch
      %21 = sbr.rel (0) target = $region9
    $region8: #{tpu_custom_call.1} parent=1 // pred_region
      %22 = dma.done [#allocation3], 256
    $region9: #{tpu_custom_call.1} parent=1 // pred_fallthru
      _
    %v23 = vld [vmem:[#allocation2] sm:$0xff]
    %v24 = vld [vmem:[#allocation2 + $0x8] sm:$0xff]
    %v25 = vxor.u32 %v23, 2147483648
    %v26 = vxor.u32 %v24, 2147483648
    %v27 = vmul.f32 %v25, 1.442695
    %v28 = vpow.pop %v27
    %v29 = vmul.f32 %v26, 1.442695
    %v30 = vpow.pop %v29
    %v31 = vadd.f32 %v28, 1.0
    %v32 = vadd.f32 %v30, 1.0
    %v33 = vrcp.pop %v31
    %v34 = vmul.f32 1.0, %v33
    %v35 = vrcp.pop %v32
    %v36 = vmul.f32 1.0, %v35
    %v37 = vmul.f32 %v23, %v34
    %v38 = vmul.f32 %v24, %v36
    %39 = vst [vmem:[#allocation5] sm:$0xff] %v37
    %40 = vst [vmem:[#allocation5 + $0x8] sm:$0xff] %v38
    // Predicated region
    $region10: #{tpu_custom_call.1} parent=1 // pred_check
      _
    $region11: #{tpu_custom_call.1} parent=1 // pred_check_branch
      %42 = sbr.rel (0) target = $region13
    $region12: #{tpu_custom_call.1} parent=1 // pred_region
      %s44 = ssub.s32 256, 256
      %45 = vsyncadd [#allocation4], %s44
      %s46 = sshll.u32 [#allocation5], 4
      %s47 = int_to_ptr.vmem [resolvable:$true] %s46
      %52 = dma.vmem_to_hbm [thread:$0]  %s47, 256, %s1, [#allocation4], 128, 128, 8
    $region13: #{tpu_custom_call.1} parent=1 // pred_fallthru
      _
    // Predicated region
    $region14: #{tpu_custom_call.1} parent=1 // pred_check
      _
    $region15: #{tpu_custom_call.1} parent=1 // pred_check_branch
      %54 = sbr.rel (0) target = $region17
    $region16: #{tpu_custom_call.1} parent=1 // pred_region
      %55 = dma.done [#allocation4], 256
    $region17: #{tpu_custom_call.1} parent=1 // pred_fallthru
      _
    %56 = vsyncpa [#allocation3], 1
    %57 = vsyncpa [#allocation4], 1

</llo_original>
